<compile_context>
chip_gen: v5e
topology: v5e:2x2
jax: 0.10.0
libtpu: 0.0.40
codegen_flags: <defaults>
</compile_context>

<pallas_src>
import functools
import math

import jax
import jax.numpy as jnp
import numpy as np
from jax.experimental import pallas as pl
from jax.experimental.pallas import tpu as pltpu

_QMAX = 240.0  # float8_e4m3fnuz max, the clamp bound used by the Wave kernel


def _cdiv(a, b):
    return -(-a // b)


def _round_up(x, m):
    return _cdiv(x, m) * m


# ---------------------------------------------------------------------------
# fp8 e4m3fnuz round-to-nearest-even, emulated with VPU integer/float ops so
# that no fp8 dtype needs to lower inside Mosaic (portable v5e/v6e/v7x).
# ---------------------------------------------------------------------------
def _round_to_e4m3fnuz(x):
    """RNE-round f32 values (already clamped to [-240, 240]) onto the
    float8_e4m3fnuz grid; result returned in f32 (every fnuz value is exact
    in f32 and bf16)."""
    a = jnp.abs(x)
    # Normal binades (|x| >= 2^-7): round the f32 mantissa to 3 bits, RNE.
    bits = pltpu.bitcast(a, jnp.int32)              # a >= 0 -> sign bit clear
    lsb = (bits >> 20) & 1
    rbits = (bits + lsb + 0x7FFFF) & (~0xFFFFF)     # drop 20 mantissa bits, RNE
    normal = pltpu.bitcast(rbits, jnp.float32)
    # Subnormal range (|x| < 2^-7): fixed step 2^-10; hardware RNE of the f32
    # adder does it (ulp(8192.0) == 2^-10).
    big = jnp.float32(8192.0)
    sub = (a + big) - big
    mag = jnp.where(a < jnp.float32(0.0078125), sub, normal)   # 2^-7 threshold
    return jnp.where(x < jnp.float32(0.0), -mag, mag)


def _quantize_tile(a, inv_scale_f32):
    """Wave prologue per tile: a * (1/input_scale), clamp to +-240 (in the
    input dtype), e4m3fnuz round-trip.  Returned in bf16 (exact for every
    fnuz value) so the MXU runs its native bf16 path."""
    dt = a.dtype
    a = a * inv_scale_f32.astype(dt)
    a = jnp.clip(a, jnp.asarray(-_QMAX, dt), jnp.asarray(_QMAX, dt))
    return _round_to_e4m3fnuz(a.astype(jnp.float32)).astype(jnp.bfloat16)


# ---------------------------------------------------------------------------
# Kernels
# ---------------------------------------------------------------------------
def _qmm_kernel_noacc(scales_ref, a_ref, w_ref, o_ref, *, out_dtype):
    """All of K resident: no accumulator scratch, single dot + dequant store."""
    a_q = _quantize_tile(a_ref[...], scales_ref[0])
    acc = jnp.dot(a_q, w_ref[...], preferred_element_type=jnp.float32)
    # Dequant epilogue in the same op order as the Wave kernel (bit parity).
    o = acc.astype(out_dtype)
    o = o * scales_ref[1].astype(out_dtype)
    o_ref[...] = o * scales_ref[2].astype(out_dtype)


def _qmm_kernel_acc(scales_ref, a_ref, w_ref, o_ref, acc_ref, *, out_dtype):
    """K tiled: f32 accumulator scratch; init at k==0, dequant at the last k."""
    k = pl.program_id(2)

    @pl.when(k == 0)
    def _init():
        acc_ref[...] = jnp.zeros_like(acc_ref)

    a_q = _quantize_tile(a_ref[...], scales_ref[0])
    acc_ref[...] += jnp.dot(a_q, w_ref[...], preferred_element_type=jnp.float32)

    @pl.when(k == pl.num_programs(2) - 1)
    def _finalize():
        o = acc_ref[...].astype(out_dtype)
        o = o * scales_ref[1].astype(out_dtype)
        o_ref[...] = o * scales_ref[2].astype(out_dtype)


# ---------------------------------------------------------------------------
# Tiling / budgets
# ---------------------------------------------------------------------------
def _vmem_budget_bytes():
    """TPU-generation-aware (tile budget, vmem_limit_bytes)."""
    try:
        cap = int(getattr(pltpu.get_tpu_info(), "vmem_capacity_bytes",
                          64 * 1024 * 1024))
    except Exception:                    # conservative fallback: assume v7x
        cap = 64 * 1024 * 1024
    if cap >= 100 * 1024 * 1024:         # v5e / v6e: 128 MiB per core
        return 56 * 1024 * 1024, 100 * 1024 * 1024
    return 22 * 1024 * 1024, 48 * 1024 * 1024      # v7x: 64 MiB per core


def _pick_tiles(m_rows, n_padded, k_padded, in_itemsize, budget_bytes):
    # tm: biggest MXU-friendly tile <= 256 that keeps M padding minimal
    # (e.g. m_rows=300 -> tm=160, not 256).
    if m_rows <= 256:
        tm = max(16, _round_up(m_rows, 16))
    else:
        tm = _round_up(_cdiv(m_rows, _cdiv(m_rows, 256)), 16)
    m_grid = _cdiv(m_rows, tm)

    # tn: 256 when it adds no padding, else 128; if the whole grid would be a
    # single tile, split N so dual-TensorCore chips (v7x) get >=2 parallel tiles.
    tn = 256 if n_padded % 256 == 0 else 128
    if m_grid == 1 and n_padded // tn == 1 and n_padded // 128 >= 2:
        tn = 128
    # TODO(synk): on v5e prefer tm=128 to match the 4x128^2 MXU shape.

    def fits(tk, k_grid):
        a_t = 2 * tm * tk * in_itemsize        # x tile, double buffered
        w_t = 2 * tk * tn * 2                  # bf16 weight tile, double buffered
        o_t = 2 * tm * tn * 2                  # output tile, double buffered
        acc = 0 if k_grid == 1 else tm * tn * 4
        qtmp = 4 * tm * tk * 4                 # fused-quant f32/i32 temporaries
        return a_t + w_t + o_t + acc + qtmp <= budget_bytes

    # tk: largest divisor of the 128-aligned K that fits the budget (no extra
    # K padding beyond the one-time 128 alignment of the cached weight).
    k128 = k_padded // 128
    tk = 128
    for d in sorted({k128 // i for i in range(1, k128 + 1) if k128 % i == 0},
                    reverse=True):
        if fits(d * 128, k128 // d):
            tk = d * 128
            break
    return tm, tn, tk


# ---------------------------------------------------------------------------
# One-time weight-side prep (cache the result; weight / weight_scale are
# static module parameters).
# ---------------------------------------------------------------------------
def quantize_weight(weight, weight_scale):
    w_dt = weight.dtype
    w_q = jnp.clip(weight * jnp.asarray(1.0 / weight_scale, w_dt),
                   jnp.asarray(-_QMAX, w_dt), jnp.asarray(_QMAX, w_dt))
    # One-time fp8 round-trip in XLA; every e4m3fnuz value is exact in bf16.
    w_q = w_q.astype(jnp.float8_e4m3fnuz).astype(jnp.bfloat16)
    w_qt = w_q.T                                   # (K, N): lane-dense RHS/out
    n_out, k_in = weight.shape
    kp, np_ = _round_up(k_in, 128), _round_up(n_out, 128)
    if (kp, np_) != w_qt.shape:
        w_qt = jnp.pad(w_qt, ((0, kp - k_in), (0, np_ - n_out)))
    return w_qt


def make_scales(input_scale, weight_scale, dtype):
    """Pack (1/input_scale, input_scale, weight_scale) -- each pre-rounded to
    the compute dtype exactly like the Wave kernel registers -- into one f32
    SMEM scalar-prefetch operand (no recompile per scale value; supports
    traced scale arrays)."""
    return jnp.stack([
        jnp.asarray(1.0 / input_scale, dtype).astype(jnp.float32),
        jnp.asarray(input_scale, dtype).astype(jnp.float32),
        jnp.asarray(weight_scale, dtype).astype(jnp.float32)])


# ---------------------------------------------------------------------------
# Forward
# ---------------------------------------------------------------------------
@functools.partial(jax.jit, static_argnames=("n_out", "tm", "tn", "tk"))
def wave_quant_linear(x, w_qt, scales, *, n_out, tm=None, tn=None, tk=None):
    """Forward pass of WaveQuantLinear (no bias, per the reference module)."""
    assert x.ndim >= 2
    out_dtype = x.dtype                      # Wave casts the acc to input dtype
    *batch, M, K = x.shape
    Kp, Np = w_qt.shape
    assert Kp == _round_up(K, 128) and Np >= n_out
    m_rows = (int(np.prod(batch)) if batch else 1) * M
    a = x.reshape(m_rows, K)                 # fold batch dims into M

    budget, vmem_limit = _vmem_budget_bytes()
    tm_d, tn_d, tk_d = _pick_tiles(m_rows, Np, Kp, a.dtype.itemsize, budget)
    tm = tm if tm is not None else tm_d
    tn = tn if tn is not None else tn_d
    tk = tk if tk is not None else tk_d

    Mp = _round_up(m_rows, tm)
    if (Mp, Kp) != (m_rows, K):              # zero-pad only when unaligned
        a = jnp.pad(a, ((0, Mp - m_rows), (0, Kp - K)))

    m_grid, n_grid, k_grid = Mp // tm, Np // tn, Kp // tk

    if k_grid == 1:
        # All of K resident: single-shot kernel, no f32 accumulator scratch.
        kernel = functools.partial(_qmm_kernel_noacc, out_dtype=out_dtype)
        grid_spec = pltpu.PrefetchScalarGridSpec(
            num_scalar_prefetch=1,
            grid=(m_grid, n_grid),
            in_specs=[pl.BlockSpec((tm, Kp), lambda i, j, s: (i, 0)),
                      pl.BlockSpec((Kp, tn), lambda i, j, s: (0, j))],
            out_specs=pl.BlockSpec((tm, tn), lambda i, j, s: (i, j)))
        dims = ("parallel", "parallel")
    else:
        kernel = functools.partial(_qmm_kernel_acc, out_dtype=out_dtype)
        w_map = lambda i, j, k, s: (k, j)
        if m_grid == 1 and k_grid >= 3 and tk * tn * 2 <= budget // 4:
            # Thin-M, bandwidth-bound: 3-deep weight pipeline hides exposed DMA.
            w_spec = pl.BlockSpec((tk, tn), w_map, pipeline_mode=pl.Buffered(3))
        else:
            w_spec = pl.BlockSpec((tk, tn), w_map)
        grid_spec = pltpu.PrefetchScalarGridSpec(
            num_scalar_prefetch=1,
            grid=(m_grid, n_grid, k_grid),
            in_specs=[pl.BlockSpec((tm, tk), lambda i, j, k, s: (i, k)), w_spec],
            out_specs=pl.BlockSpec((tm, tn), lambda i, j, k, s: (i, j)),
            scratch_shapes=[pltpu.VMEM((tm, tn), jnp.float32)])
        dims = ("parallel", "parallel", "arbitrary")

    out = pl.pallas_call(
        kernel,
        out_shape=jax.ShapeDtypeStruct((Mp, Np), out_dtype),
        grid_spec=grid_spec,
        compiler_params=pltpu.CompilerParams(
            dimension_semantics=dims, vmem_limit_bytes=vmem_limit),
    )(scales, a, w_qt)

    return out[:m_rows, :n_out].reshape(*batch, M, n_out)


class WaveQuantLinearTPU:
    """JAX/Pallas analogue of WaveQuantLinear: per-tensor fp8-e4m3fnuz
    quantized linear, no bias (the reference module rejects bias)."""

    def __init__(self, weight, *, input_scale, weight_scale, bias=None):
        if bias is not None:
            raise ValueError("Bias is currently not supported")
        if weight.dtype not in (np.dtype(jnp.bfloat16), np.dtype(jnp.float16)):
            raise ValueError(f"unsupported dtype: {weight.dtype}")
        self.dtype = weight.dtype
        self.out_features, self.in_features = weight.shape
        # Weight-side quantize/transpose/pad happens exactly once and is cached.
        self.w_qt = jax.block_until_ready(quantize_weight(weight, weight_scale))
        self.scales = make_scales(input_scale, weight_scale, self.dtype)

    def __call__(self, x, *, tm=None, tn=None, tk=None):
        assert x.ndim >= 2 and x.shape[-1] == self.in_features
        assert x.dtype == self.dtype, "input dtype must match weight dtype"
        return wave_quant_linear(x, self.w_qt, self.scales,
                                 n_out=self.out_features, tm=tm, tn=tn, tk=tk)


if __name__ == "__main__":
    key = jax.random.PRNGKey(0)
    in_features, out_features = 256, 128
    batch, seq = (2, 3), 16
    dtype = jnp.bfloat16                     # module supports {float16, bfloat16}

    kw, kx = jax.random.split(key)
    # kaiming_uniform(a=sqrt(5)) on a (N, K) weight => uniform(-1/sqrt(K), 1/sqrt(K))
    bound = 1.0 / math.sqrt(in_features)
    weight = jax.random.uniform(kw, (out_features, in_features),
                                minval=-bound, maxval=bound).astype(dtype)
    x = (0.5 * jax.random.normal(kx, (*batch, seq, in_features))).astype(dtype)

    input_scale, weight_scale = 0.05, 0.02   # per-tensor scales (numel == 1)

    layer = WaveQuantLinearTPU(weight, input_scale=input_scale,
                               weight_scale=weight_scale)
    out = jax.block_until_ready(layer(x))
    assert out.shape == (*batch, seq, out_features)
    assert out.dtype == dtype

    # Pure-JAX reference with identical semantics (real fp8 round-trip in XLA).
    a_q = jnp.clip(x * jnp.asarray(1.0 / input_scale, dtype),
                   jnp.asarray(-_QMAX, dtype), jnp.asarray(_QMAX, dtype))
    a_q = a_q.astype(jnp.float8_e4m3fnuz).astype(jnp.float32)
    w_q = jnp.clip(weight * jnp.asarray(1.0 / weight_scale, dtype),
                   jnp.asarray(-_QMAX, dtype), jnp.asarray(_QMAX, dtype))
    w_q = w_q.astype(jnp.float8_e4m3fnuz).astype(jnp.float32)
    acc = jnp.einsum("...mk,nk->...mn", a_q, w_q)
    ref = (acc.astype(dtype)
           * jnp.asarray(input_scale, dtype)
           * jnp.asarray(weight_scale, dtype))

    np.testing.assert_allclose(np.asarray(out, dtype=np.float32),
                               np.asarray(ref, dtype=np.float32),
                               rtol=2e-2, atol=2e-3)

    # Also exercise the K-tiled accumulator path with forced small tiles.
    out2 = jax.block_until_ready(layer(x, tm=32, tn=128, tk=128))
    np.testing.assert_allclose(np.asarray(out2, dtype=np.float32),
                               np.asarray(ref, dtype=np.float32),
                               rtol=2e-2, atol=2e-3)
    print("KERNEL_OK")
</pallas_src>

<mosaic_0001>
module attributes {stable_mosaic.version = 11 : i64} {
  func.func @_qmm_kernel_noacc(%arg0: i32, %arg1: i32, %arg2: memref<3xf32, #tpu.memory_space<smem>>, %arg3: memref<96x256xbf16, #tpu.memory_space<vmem>>, %arg4: memref<256x128xbf16, #tpu.memory_space<vmem>>, %arg5: memref<96x128xbf16, #tpu.memory_space<vmem>>) attributes {dimension_semantics = [#tpu.dimension_semantics<parallel>, #tpu.dimension_semantics<parallel>], iteration_bounds = array<i64: 1, 1>, scalar_prefetch = 1 : i64, scratch_operands = 0 : i64, tpu.core_type = #tpu.core_type<tc>, window_params = [{transform_indices = @transform_0, window_bounds = array<i64: 96, 256>}, {transform_indices = @transform_1, window_bounds = array<i64: 256, 128>}, {transform_indices = @transform_2, window_bounds = array<i64: 96, 128>}]} {
    %c0 = arith.constant 0 : index
    %c0_0 = arith.constant 0 : index
    %0 = vector.load %arg3[%c0, %c0_0] : memref<96x256xbf16, #tpu.memory_space<vmem>>, vector<96x256xbf16>
    %c0_1 = arith.constant 0 : index
    %1 = memref.load %arg2[%c0_1] : memref<3xf32, #tpu.memory_space<smem>>
    %2 = arith.truncf %1 : f32 to bf16
    %3 = vector.broadcast %2 : bf16 to vector<96x256xbf16>
    %4 = arith.mulf %0, %3 : vector<96x256xbf16>
    %cst = arith.constant -2.400000e+02 : bf16
    %cst_2 = arith.constant 2.400000e+02 : bf16
    %5 = vector.broadcast %cst : bf16 to vector<96x256xbf16>
    %6 = arith.maximumf %5, %4 : vector<96x256xbf16>
    %7 = vector.broadcast %cst_2 : bf16 to vector<96x256xbf16>
    %8 = arith.minimumf %7, %6 : vector<96x256xbf16>
    %9 = arith.extf %8 : vector<96x256xbf16> to vector<96x256xf32>
    %10 = math.absf %9 : vector<96x256xf32>
    %11 = tpu.bitcast %10 : vector<96x256xf32> -> vector<96x256xi32>
    %c20_i32 = arith.constant 20 : i32
    %12 = vector.broadcast %c20_i32 : i32 to vector<96x256xi32>
    %13 = arith.shrsi %11, %12 : vector<96x256xi32>
    %c1_i32 = arith.constant 1 : i32
    %14 = vector.broadcast %c1_i32 : i32 to vector<96x256xi32>
    %15 = arith.andi %13, %14 : vector<96x256xi32>
    %16 = arith.addi %11, %15 : vector<96x256xi32>
    %c524287_i32 = arith.constant 524287 : i32
    %17 = vector.broadcast %c524287_i32 : i32 to vector<96x256xi32>
    %18 = arith.addi %16, %17 : vector<96x256xi32>
    %c-1048576_i32 = arith.constant -1048576 : i32
    %19 = vector.broadcast %c-1048576_i32 : i32 to vector<96x256xi32>
    %20 = arith.andi %18, %19 : vector<96x256xi32>
    %21 = tpu.bitcast %20 : vector<96x256xi32> -> vector<96x256xf32>
    %cst_3 = arith.constant 8.192000e+03 : f32
    %22 = vector.broadcast %cst_3 : f32 to vector<96x256xf32>
    %23 = arith.addf %10, %22 : vector<96x256xf32>
    %cst_4 = arith.constant 8.192000e+03 : f32
    %24 = vector.broadcast %cst_4 : f32 to vector<96x256xf32>
    %25 = arith.subf %23, %24 : vector<96x256xf32>
    %cst_5 = arith.constant 7.812500e-03 : f32
    %26 = vector.broadcast %cst_5 : f32 to vector<96x256xf32>
    %27 = arith.cmpf olt, %10, %26 : vector<96x256xf32>
    %28 = arith.select %27, %25, %21 : vector<96x256xi1>, vector<96x256xf32>
    %cst_6 = arith.constant 0.000000e+00 : f32
    %29 = vector.broadcast %cst_6 : f32 to vector<96x256xf32>
    %30 = arith.cmpf olt, %9, %29 : vector<96x256xf32>
    %cst_7 = arith.constant 0.000000e+00 : f32
    %31 = vector.broadcast %cst_7 : f32 to vector<96x256xf32>
    %32 = arith.subf %31, %28 : vector<96x256xf32>
    %33 = arith.select %30, %32, %28 : vector<96x256xi1>, vector<96x256xf32>
    %34 = arith.truncf %33 : vector<96x256xf32> to vector<96x256xbf16>
    %c0_8 = arith.constant 0 : index
    %c0_9 = arith.constant 0 : index
    %35 = vector.load %arg4[%c0_8, %c0_9] : memref<256x128xbf16, #tpu.memory_space<vmem>>, vector<256x128xbf16>
    %cst_10 = arith.constant dense<0.000000e+00> : vector<96x128xf32>
    %36 = tpu.matmul %34, %35, %cst_10 {dimension_numbers = #tpu.dot_dimension_numbers<[1], [0], [0], [1], [0, 0, 1, 1], [], []>} : vector<96x256xbf16>, vector<256x128xbf16>, vector<96x128xf32> -> vector<96x128xf32>
    %37 = arith.truncf %36 : vector<96x128xf32> to vector<96x128xbf16>
    %c1 = arith.constant 1 : index
    %38 = memref.load %arg2[%c1] : memref<3xf32, #tpu.memory_space<smem>>
    %39 = arith.truncf %38 : f32 to bf16
    %40 = vector.broadcast %39 : bf16 to vector<96x128xbf16>
    %41 = arith.mulf %37, %40 : vector<96x128xbf16>
    %c2 = arith.constant 2 : index
    %42 = memref.load %arg2[%c2] : memref<3xf32, #tpu.memory_space<smem>>
    %43 = arith.truncf %42 : f32 to bf16
    %44 = vector.broadcast %43 : bf16 to vector<96x128xbf16>
    %45 = arith.mulf %41, %44 : vector<96x128xbf16>
    %c0_11 = arith.constant 0 : index
    %c0_12 = arith.constant 0 : index
    %46 = vector.load %arg5[%c0_11, %c0_12] : memref<96x128xbf16, #tpu.memory_space<vmem>>, vector<96x128xbf16>
    tpu.vector_store %arg5[%c0_11, %c0_12], %45 {strides = array<i32>} : memref<96x128xbf16, #tpu.memory_space<vmem>>, vector<96x128xbf16>,
    return
  }
  func.func @transform_0(%arg0: i32, %arg1: i32, %arg2: memref<3xf32, #tpu.memory_space<smem>>) -> (i32, i32) {
    %c0_i32 = arith.constant 0 : i32
    %c0_i32_0 = arith.constant 0 : i32
    return %arg0, %c0_i32 : i32, i32
  }
  func.func @transform_1(%arg0: i32, %arg1: i32, %arg2: memref<3xf32, #tpu.memory_space<smem>>) -> (i32, i32) {
    %c0_i32 = arith.constant 0 : i32
    %c0_i32_0 = arith.constant 0 : i32
    return %c0_i32, %arg1 : i32, i32
  }
  func.func @transform_2(%arg0: i32, %arg1: i32, %arg2: memref<3xf32, #tpu.memory_space<smem>>) -> (i32, i32) {
    %c0_i32 = arith.constant 0 : i32
    return %arg0, %arg1 : i32, i32
  }
}

</mosaic_0001>

<llo_original>
// kernel: wave_quant_linear.1
$region0: #{wave_quant_linear.1}
  #allocation0 [shape = 'u32[]', space=smem, size = 0x4, offset = 0x4, fixed_abs, tag = 'smem constant byte address 0x4 - core index']
  #allocation1 [shape = 'u32[72,128]{1,0:T(1,128)}', space=vmem, size = 0x9000, scoped, tag = 'internal scratch']
  #allocation2 [shape = 's32[1]{0}', space=sflag, size = 0x4, scoped, tag = 'scoped memory for wave_quant_linear.1']
  #allocation3 [shape = 'u8[512]{0}', space=smem, size = 0x200, scoped, tag = 'prefetched SMEM operand 0']
  %s0 = inlined_call_operand.vmem [shape: f32[3], index: 0, kind: input, shape index: {}]
  %s1 = inlined_call_operand.hbm [shape: bf16[96,256], index: 1, kind: input, shape index: {}]
  %s2 = inlined_call_operand.hbm [shape: bf16[256,128], index: 2, kind: input, shape index: {}]
  %s3 = inlined_call_operand.hbm [shape: bf16[96,128], index: 3, kind: output, shape index: {}]
  %s4 = sld [smem:[#allocation0]]
  $region26: #{wave_quant_linear.1} parent=0
    _
  %s6 = ssub.s32 1, %s4
  %s7 = scalar_select 0, %s6, %s4
  %s9 = sshll.u32 %s0, 4
  %s10 = int_to_ptr.vmem [resolvable:$true] %s9
  %12 = dma.vmem_to_smem %s10, 16, [#allocation3], [#allocation2]
  %14 = dma.done [#allocation2], 16
  %15 = sfence
  $region1: #{wave_quant_linear.1} parent=0
    #allocation4 [shape = 'u8[49152]{0}', space=vmem, size = 0xc000, scoped, tag = 'input window, operand 1, single buffered']
    #allocation5 [shape = 's32[1]{0}', space=sflag, size = 0x4, scoped, tag = 'scoped memory for wave_quant_linear.1']
    #allocation6 [shape = 's32[1]{0}', space=sflag, size = 0x4, scoped, tag = 'scoped memory for wave_quant_linear.1']
    #allocation7 [shape = 'u8[65536]{0}', space=vmem, size = 0x10000, scoped, tag = 'input window, operand 2, single buffered']
    #allocation8 [shape = 's32[1]{0}', space=sflag, size = 0x4, scoped, tag = 'scoped memory for wave_quant_linear.1']
    #allocation9 [shape = 'u8[24576]{0}', space=vmem, size = 0x6000, scoped, tag = 'output window, operand 0, single buffered']
    %16 = vsyncpa [#allocation5], 0
    %17 = vsyncpa [#allocation8], 0
    %18 = vsyncpa [#allocation6], 0
    // Predicated region
    $region2: #{wave_quant_linear.1} parent=1 // pred_check
      _
    $region3: #{wave_quant_linear.1} parent=1 // pred_check_branch
      %20 = sbr.rel (0) target = $region5
    $region4: #{wave_quant_linear.1} parent=1 // pred_region
      %22 = vsyncadd [#allocation5], 0
      %s23 = sshll.u32 %s1, 4
      %s24 = int_to_ptr.hbm [resolvable:$true] %s23
      %s25 = sshll.u32 [#allocation4], 4
      %s26 = int_to_ptr.vmem [resolvable:$true] %s25
      %31 = dma.hbm_to_vmem [thread:$0]  %s24, 1536, %s26, [#allocation5], 128, 128, 8
    $region5: #{wave_quant_linear.1} parent=1 // pred_fallthru
      _
    // Predicated region
    $region6: #{wave_quant_linear.1} parent=1 // pred_check
      _
    $region7: #{wave_quant_linear.1} parent=1 // pred_check_branch
      %33 = sbr.rel (0) target = $region9
    $region8: #{wave_quant_linear.1} parent=1 // pred_region
      %35 = vsyncadd [#allocation8], 0
      %s36 = sshll.u32 %s2, 4
      %s37 = int_to_ptr.hbm [resolvable:$true] %s36
      %s38 = sshll.u32 [#allocation7], 4
      %s39 = int_to_ptr.vmem [resolvable:$true] %s38
      %44 = dma.hbm_to_vmem [thread:$0]  %s37, 2048, %s39, [#allocation8], 64, 64, 4
    $region9: #{wave_quant_linear.1} parent=1 // pred_fallthru
      _
    // Predicated region
    $region10: #{wave_quant_linear.1} parent=1 // pred_check
      _
    $region11: #{wave_quant_linear.1} parent=1 // pred_check_branch
      %46 = sbr.rel (0) target = $region13
    $region12: #{wave_quant_linear.1} parent=1 // pred_region
      %48 = dma.done [#allocation5], 1536
    $region13: #{wave_quant_linear.1} parent=1 // pred_fallthru
      _
    // Predicated region
    $region14: #{wave_quant_linear.1} parent=1 // pred_check
      _
    $region15: #{wave_quant_linear.1} parent=1 // pred_check_branch
      %50 = sbr.rel (0) target = $region17
    $region16: #{wave_quant_linear.1} parent=1 // pred_region
      %52 = dma.done [#allocation8], 2048
    $region17: #{wave_quant_linear.1} parent=1 // pred_fallthru
      _
    %v53 = vld [vmem:[#allocation4] sm:$0xff]
    %v54 = vld [vmem:[#allocation4 + $0x8] sm:$0xff]
    %v55 = vld [vmem:[#allocation4 + $0x10] sm:$0xff]
    %v56 = vld [vmem:[#allocation4 + $0x18] sm:$0xff]
    %v57 = vld [vmem:[#allocation4 + $0x20] sm:$0xff]
    %v58 = vld [vmem:[#allocation4 + $0x28] sm:$0xff]
    %v59 = vld [vmem:[#allocation4 + $0x30] sm:$0xff]
    %v60 = vld [vmem:[#allocation4 + $0x38] sm:$0xff]
    %v61 = vld [vmem:[#allocation4 + $0x40] sm:$0xff]
    %v62 = vld [vmem:[#allocation4 + $0x48] sm:$0xff]
    %v63 = vld [vmem:[#allocation4 + $0x50] sm:$0xff]
    %v64 = vld [vmem:[#allocation4 + $0x58] sm:$0xff]
    %s65 = sld [smem:[#allocation3]]
    %p67 = scmp.ne.f32.partialorder %s65, %s65
    %s68 = sshrl.u32 %s65, 16
    %s69 = sand.u32 %s68, 1
    %s70 = sadd.s32 32767, %s69
    %s71 = sadd.s32 %s65, %s70
    %s72 = sand.u32 %s71, 4294901760
    %s73 = scalar_select %p67, 2143289344, %s72
    %s75 = sshrl.u32 %s73, 16
    %s76 = sshll.u32 %s75, 16
    %s77 = sor.u32 %s75, %s76
    %v78 = vstv %s77
    %v80 = vunpack.c.l.bf16 %v53
    %v81 = vunpack.c.h.bf16 %v53
    %v82 = vunpack.c.l.bf16 %v54
    %v83 = vunpack.c.h.bf16 %v54
    %v84 = vunpack.c.l.bf16 %v55
    %v85 = vunpack.c.h.bf16 %v55
    %v86 = vunpack.c.l.bf16 %v56
    %v87 = vunpack.c.h.bf16 %v56
    %v88 = vunpack.c.l.bf16 %v57
    %v89 = vunpack.c.h.bf16 %v57
    %v90 = vunpack.c.l.bf16 %v58
    %v91 = vunpack.c.h.bf16 %v58
    %v92 = vunpack.c.l.bf16 %v59
    %v93 = vunpack.c.h.bf16 %v59
    %v94 = vunpack.c.l.bf16 %v60
    %v95 = vunpack.c.h.bf16 %v60
    %v96 = vunpack.c.l.bf16 %v61
    %v97 = vunpack.c.h.bf16 %v61
    %v98 = vunpack.c.l.bf16 %v62
    %v99 = vunpack.c.h.bf16 %v62
    %v100 = vunpack.c.l.bf16 %v63
    %v101 = vunpack.c.h.bf16 %v63
    %v102 = vunpack.c.l.bf16 %v64
    %v103 = vunpack.c.h.bf16 %v64
    %v104 = vunpack.c.l.bf16 %v78
    %v105 = vmul.f32 %v80, %v104
    %v106 = vmul.f32 %v81, %v104
    %v107 = vmul.f32 %v82, %v104
    %v108 = vmul.f32 %v83, %v104
    %v109 = vmul.f32 %v84, %v104
    %v110 = vmul.f32 %v85, %v104
    %v111 = vmul.f32 %v86, %v104
    %v112 = vmul.f32 %v87, %v104
    %v113 = vmul.f32 %v88, %v104
    %v114 = vmul.f32 %v89, %v104
    %v115 = vmul.f32 %v90, %v104
    %v116 = vmul.f32 %v91, %v104
    %v117 = vmul.f32 %v92, %v104
    %v118 = vmul.f32 %v93, %v104
    %v119 = vmul.f32 %v94, %v104
    %v120 = vmul.f32 %v95, %v104
    %v121 = vmul.f32 %v96, %v104
    %v122 = vmul.f32 %v97, %v104
    %v123 = vmul.f32 %v98, %v104
    %v124 = vmul.f32 %v99, %v104
    %v125 = vmul.f32 %v100, %v104
    %v126 = vmul.f32 %v101, %v104
    %v127 = vmul.f32 %v102, %v104
    %v128 = vmul.f32 %v103, %v104
    %v129 = vpack.c.bf16 %v106, %v105
    %v130 = vpack.c.bf16 %v108, %v107
    %v131 = vpack.c.bf16 %v110, %v109
    %v132 = vpack.c.bf16 %v112, %v111
    %v133 = vpack.c.bf16 %v114, %v113
    %v134 = vpack.c.bf16 %v116, %v115
    %v135 = vpack.c.bf16 %v118, %v117
    %v136 = vpack.c.bf16 %v120, %v119
    %v137 = vpack.c.bf16 %v122, %v121
    %v138 = vpack.c.bf16 %v124, %v123
    %v139 = vpack.c.bf16 %v126, %v125
    %v140 = vpack.c.bf16 %v128, %v127
    %v141 = vunpack.c.l.bf16 %v129
    %v142 = vunpack.c.h.bf16 %v129
    %v143 = vunpack.c.l.bf16 %v130
    %v144 = vunpack.c.h.bf16 %v130
    %v145 = vunpack.c.l.bf16 %v131
    %v146 = vunpack.c.h.bf16 %v131
    %v147 = vunpack.c.l.bf16 %v132
    %v148 = vunpack.c.h.bf16 %v132
    %v149 = vunpack.c.l.bf16 %v133
    %v150 = vunpack.c.h.bf16 %v133
    %v151 = vunpack.c.l.bf16 %v134
    %v152 = vunpack.c.h.bf16 %v134
    %v153 = vunpack.c.l.bf16 %v135
    %v154 = vunpack.c.h.bf16 %v135
    %v155 = vunpack.c.l.bf16 %v136
    %v156 = vunpack.c.h.bf16 %v136
    %v157 = vunpack.c.l.bf16 %v137
    %v158 = vunpack.c.h.bf16 %v137
    %v159 = vunpack.c.l.bf16 %v138
    %v160 = vunpack.c.h.bf16 %v138
    %v161 = vunpack.c.l.bf16 %v139
    %v162 = vunpack.c.h.bf16 %v139
    %v163 = vunpack.c.l.bf16 %v140
    %v164 = vunpack.c.h.bf16 %v140
    %v165 = vmax.f32 %v141, -240.0
    %v166 = vmax.f32 %v142, -240.0
    %v167 = vmax.f32 %v143, -240.0
    %v168 = vmax.f32 %v144, -240.0
    %v169 = vmax.f32 %v145, -240.0
    %v170 = vmax.f32 %v146, -240.0
    %v171 = vmax.f32 %v147, -240.0
    %v172 = vmax.f32 %v148, -240.0
    %v173 = vmax.f32 %v149, -240.0
    %v174 = vmax.f32 %v150, -240.0
    %v175 = vmax.f32 %v151, -240.0
    %v176 = vmax.f32 %v152, -240.0
    %v177 = vmax.f32 %v153, -240.0
    %v178 = vmax.f32 %v154, -240.0
    %v179 = vmax.f32 %v155, -240.0
    %v180 = vmax.f32 %v156, -240.0
    %v181 = vmax.f32 %v157, -240.0
    %v182 = vmax.f32 %v158, -240.0
    %v183 = vmax.f32 %v159, -240.0
    %v184 = vmax.f32 %v160, -240.0
    %v185 = vmax.f32 %v161, -240.0
    %v186 = vmax.f32 %v162, -240.0
    %v187 = vmax.f32 %v163, -240.0
    %v188 = vmax.f32 %v164, -240.0
    %v189 = vpack.c.bf16 %v166, %v165
    %v190 = vpack.c.bf16 %v168, %v167
    %v191 = vpack.c.bf16 %v170, %v169
    %v192 = vpack.c.bf16 %v172, %v171
    %v193 = vpack.c.bf16 %v174, %v173
    %v194 = vpack.c.bf16 %v176, %v175
    %v195 = vpack.c.bf16 %v178, %v177
    %v196 = vpack.c.bf16 %v180, %v179
    %v197 = vpack.c.bf16 %v182, %v181
    %v198 = vpack.c.bf16 %v184, %v183
    %v199 = vpack.c.bf16 %v186, %v185
    %v200 = vpack.c.bf16 %v188, %v187
    %v201 = vunpack.c.l.bf16 %v189
    %v202 = vunpack.c.h.bf16 %v189
    %v203 = vunpack.c.l.bf16 %v190
    %v204 = vunpack.c.h.bf16 %v190
    %v205 = vunpack.c.l.bf16 %v191
    %v206 = vunpack.c.h.bf16 %v191
    %v207 = vunpack.c.l.bf16 %v192
    %v208 = vunpack.c.h.bf16 %v192
    %v209 = vunpack.c.l.bf16 %v193
    %v210 = vunpack.c.h.bf16 %v193
    %v211 = vunpack.c.l.bf16 %v194
    %v212 = vunpack.c.h.bf16 %v194
    %v213 = vunpack.c.l.bf16 %v195
    %v214 = vunpack.c.h.bf16 %v195
    %v215 = vunpack.c.l.bf16 %v196
    %v216 = vunpack.c.h.bf16 %v196
    %v217 = vunpack.c.l.bf16 %v197
    %v218 = vunpack.c.h.bf16 %v197
    %v219 = vunpack.c.l.bf16 %v198
    %v220 = vunpack.c.h.bf16 %v198
    %v221 = vunpack.c.l.bf16 %v199
    %v222 = vunpack.c.h.bf16 %v199
    %v223 = vunpack.c.l.bf16 %v200
    %v224 = vunpack.c.h.bf16 %v200
    %v225 = vmin.f32 %v201, 240.0
    %v226 = vmin.f32 %v202, 240.0
    %v227 = vmin.f32 %v203, 240.0
    %v228 = vmin.f32 %v204, 240.0
    %v229 = vmin.f32 %v205, 240.0
    %v230 = vmin.f32 %v206, 240.0
    %v231 = vmin.f32 %v207, 240.0
    %v232 = vmin.f32 %v208, 240.0
    %v233 = vmin.f32 %v209, 240.0
    %v234 = vmin.f32 %v210, 240.0
    %v235 = vmin.f32 %v211, 240.0
    %v236 = vmin.f32 %v212, 240.0
    %v237 = vmin.f32 %v213, 240.0
    %v238 = vmin.f32 %v214, 240.0
    %v239 = vmin.f32 %v215, 240.0
    %v240 = vmin.f32 %v216, 240.0
    %v241 = vmin.f32 %v217, 240.0
    %v242 = vmin.f32 %v218, 240.0
    %v243 = vmin.f32 %v219, 240.0
    %v244 = vmin.f32 %v220, 240.0
    %v245 = vmin.f32 %v221, 240.0
    %v246 = vmin.f32 %v222, 240.0
    %v247 = vmin.f32 %v223, 240.0
    %v248 = vmin.f32 %v224, 240.0
    %v249 = vpack.c.bf16 %v226, %v225
    %v250 = vpack.c.bf16 %v228, %v227
    %v251 = vpack.c.bf16 %v230, %v229
    %v252 = vpack.c.bf16 %v232, %v231
    %v253 = vpack.c.bf16 %v234, %v233
    %v254 = vpack.c.bf16 %v236, %v235
    %v255 = vpack.c.bf16 %v238, %v237
    %v256 = vpack.c.bf16 %v240, %v239
    %v257 = vpack.c.bf16 %v242, %v241
    %v258 = vpack.c.bf16 %v244, %v243
    %v259 = vpack.c.bf16 %v246, %v245
    %v260 = vpack.c.bf16 %v248, %v247
    %v261 = vunpack.c.l.bf16 %v249
    %v262 = vunpack.c.h.bf16 %v249
    %v263 = vunpack.c.l.bf16 %v250
    %v264 = vunpack.c.h.bf16 %v250
    %v265 = vunpack.c.l.bf16 %v251
    %v266 = vunpack.c.h.bf16 %v251
    %v267 = vunpack.c.l.bf16 %v252
    %v268 = vunpack.c.h.bf16 %v252
    %v269 = vunpack.c.l.bf16 %v253
    %v270 = vunpack.c.h.bf16 %v253
    %v271 = vunpack.c.l.bf16 %v254
    %v272 = vunpack.c.h.bf16 %v254
    %v273 = vunpack.c.l.bf16 %v255
    %v274 = vunpack.c.h.bf16 %v255
    %v275 = vunpack.c.l.bf16 %v256
    %v276 = vunpack.c.h.bf16 %v256
    %v277 = vunpack.c.l.bf16 %v257
    %v278 = vunpack.c.h.bf16 %v257
    %v279 = vunpack.c.l.bf16 %v258
    %v280 = vunpack.c.h.bf16 %v258
    %v281 = vunpack.c.l.bf16 %v259
    %v282 = vunpack.c.h.bf16 %v259
    %v283 = vunpack.c.l.bf16 %v260
    %v284 = vunpack.c.h.bf16 %v260
    %v285 = vand.u32 2147483647, %v261
    %v286 = vand.u32 2147483647, %v262
    %v287 = vand.u32 2147483647, %v263
    %v288 = vand.u32 2147483647, %v264
    %v289 = vand.u32 2147483647, %v265
    %v290 = vand.u32 2147483647, %v266
    %v291 = vand.u32 2147483647, %v267
    %v292 = vand.u32 2147483647, %v268
    %v293 = vand.u32 2147483647, %v269
    %v294 = vand.u32 2147483647, %v270
    %v295 = vand.u32 2147483647, %v271
    %v296 = vand.u32 2147483647, %v272
    %v297 = vand.u32 2147483647, %v273
    %v298 = vand.u32 2147483647, %v274
    %v299 = vand.u32 2147483647, %v275
    %v300 = vand.u32 2147483647, %v276
    %v301 = vand.u32 2147483647, %v277
    %v302 = vand.u32 2147483647, %v278
    %v303 = vand.u32 2147483647, %v279
    %v304 = vand.u32 2147483647, %v280
    %v305 = vand.u32 2147483647, %v281
    %v306 = vand.u32 2147483647, %v282
    %v307 = vand.u32 2147483647, %v283
    %v308 = vand.u32 2147483647, %v284
    %v333 = vshra.s32 %v285, 20
    %v334 = vshra.s32 %v286, 20
    %v335 = vshra.s32 %v287, 20
    %v336 = vshra.s32 %v288, 20
    %v337 = vshra.s32 %v289, 20
    %v338 = vshra.s32 %v290, 20
    %v339 = vshra.s32 %v291, 20
    %v340 = vshra.s32 %v292, 20
    %v341 = vshra.s32 %v293, 20
    %v342 = vshra.s32 %v294, 20
    %v343 = vshra.s32 %v295, 20
    %v344 = vshra.s32 %v296, 20
    %v345 = vshra.s32 %v297, 20
    %v346 = vshra.s32 %v298, 20
    %v347 = vshra.s32 %v299, 20
    %v348 = vshra.s32 %v300, 20
    %v349 = vshra.s32 %v301, 20
    %v350 = vshra.s32 %v302, 20
    %v351 = vshra.s32 %v303, 20
    %v352 = vshra.s32 %v304, 20
    %v353 = vshra.s32 %v305, 20
    %v354 = vshra.s32 %v306, 20
    %v355 = vshra.s32 %v307, 20
    %v356 = vshra.s32 %v308, 20
    %v357 = vand.u32 %v333, 1
    %v358 = vand.u32 %v334, 1
    %v359 = vand.u32 %v335, 1
    %v360 = vand.u32 %v336, 1
    %v361 = vand.u32 %v337, 1
    %v362 = vand.u32 %v338, 1
    %v363 = vand.u32 %v339, 1
    %v364 = vand.u32 %v340, 1
    %v365 = vand.u32 %v341, 1
    %v366 = vand.u32 %v342, 1
    %v367 = vand.u32 %v343, 1
    %v368 = vand.u32 %v344, 1
    %v369 = vand.u32 %v345, 1
    %v370 = vand.u32 %v346, 1
    %v371 = vand.u32 %v347, 1
    %v372 = vand.u32 %v348, 1
    %v373 = vand.u32 %v349, 1
    %v374 = vand.u32 %v350, 1
    %v375 = vand.u32 %v351, 1
    %v376 = vand.u32 %v352, 1
    %v377 = vand.u32 %v353, 1
    %v378 = vand.u32 %v354, 1
    %v379 = vand.u32 %v355, 1
    %v380 = vand.u32 %v356, 1
    %v381 = vadd.s32 %v285, %v357
    %v382 = vadd.s32 %v286, %v358
    %v383 = vadd.s32 %v287, %v359
    %v384 = vadd.s32 %v288, %v360
    %v385 = vadd.s32 %v289, %v361
    %v386 = vadd.s32 %v290, %v362
    %v387 = vadd.s32 %v291, %v363
    %v388 = vadd.s32 %v292, %v364
    %v389 = vadd.s32 %v293, %v365
    %v390 = vadd.s32 %v294, %v366
    %v391 = vadd.s32 %v295, %v367
    %v392 = vadd.s32 %v296, %v368
    %v393 = vadd.s32 %v297, %v369
    %v394 = vadd.s32 %v298, %v370
    %v395 = vadd.s32 %v299, %v371
    %v396 = vadd.s32 %v300, %v372
    %v397 = vadd.s32 %v301, %v373
    %v398 = vadd.s32 %v302, %v374
    %v399 = vadd.s32 %v303, %v375
    %v400 = vadd.s32 %v304, %v376
    %v401 = vadd.s32 %v305, %v377
    %v402 = vadd.s32 %v306, %v378
    %v403 = vadd.s32 %v307, %v379
    %v404 = vadd.s32 %v308, %v380
    %v405 = vadd.s32 %v381, 524287
    %v406 = vadd.s32 %v382, 524287
    %v407 = vadd.s32 %v383, 524287
    %v408 = vadd.s32 %v384, 524287
    %v409 = vadd.s32 %v385, 524287
    %v410 = vadd.s32 %v386, 524287
    %v411 = vadd.s32 %v387, 524287
    %v412 = vadd.s32 %v388, 524287
    %v413 = vadd.s32 %v389, 524287
    %v414 = vadd.s32 %v390, 524287
    %v415 = vadd.s32 %v391, 524287
    %v416 = vadd.s32 %v392, 524287
    %v417 = vadd.s32 %v393, 524287
    %v418 = vadd.s32 %v394, 524287
    %v419 = vadd.s32 %v395, 524287
    %v420 = vadd.s32 %v396, 524287
    %v421 = vadd.s32 %v397, 524287
    %v422 = vadd.s32 %v398, 524287
    %v423 = vadd.s32 %v399, 524287
    %v424 = vadd.s32 %v400, 524287
    %v425 = vadd.s32 %v401, 524287
    %v426 = vadd.s32 %v402, 524287
    %v427 = vadd.s32 %v403, 524287
    %v428 = vadd.s32 %v404, 524287
    %v429 = vand.u32 %v405, 4293918720
    %v430 = vand.u32 %v406, 4293918720
    %v431 = vand.u32 %v407, 4293918720
    %v432 = vand.u32 %v408, 4293918720
    %v433 = vand.u32 %v409, 4293918720
    %v434 = vand.u32 %v410, 4293918720
    %v435 = vand.u32 %v411, 4293918720
    %v436 = vand.u32 %v412, 4293918720
    %v437 = vand.u32 %v413, 4293918720
    %v438 = vand.u32 %v414, 4293918720
    %v439 = vand.u32 %v415, 4293918720
    %v440 = vand.u32 %v416, 4293918720
    %v441 = vand.u32 %v417, 4293918720
    %v442 = vand.u32 %v418, 4293918720
    %v443 = vand.u32 %v419, 4293918720
    %v444 = vand.u32 %v420, 4293918720
    %v445 = vand.u32 %v421, 4293918720
    %v446 = vand.u32 %v422, 4293918720
    %v447 = vand.u32 %v423, 4293918720
    %v448 = vand.u32 %v424, 4293918720
    %v449 = vand.u32 %v425, 4293918720
    %v450 = vand.u32 %v426, 4293918720
    %v451 = vand.u32 %v427, 4293918720
    %v452 = vand.u32 %v428, 4293918720
    %v477 = vadd.f32 %v285, 8192.0
    %v478 = vadd.f32 %v286, 8192.0
    %v479 = vadd.f32 %v287, 8192.0
    %v480 = vadd.f32 %v288, 8192.0
    %v481 = vadd.f32 %v289, 8192.0
    %v482 = vadd.f32 %v290, 8192.0
    %v483 = vadd.f32 %v291, 8192.0
    %v484 = vadd.f32 %v292, 8192.0
    %v485 = vadd.f32 %v293, 8192.0
    %v486 = vadd.f32 %v294, 8192.0
    %v487 = vadd.f32 %v295, 8192.0
    %v488 = vadd.f32 %v296, 8192.0
    %v489 = vadd.f32 %v297, 8192.0
    %v490 = vadd.f32 %v298, 8192.0
    %v491 = vadd.f32 %v299, 8192.0
    %v492 = vadd.f32 %v300, 8192.0
    %v493 = vadd.f32 %v301, 8192.0
    %v494 = vadd.f32 %v302, 8192.0
    %v495 = vadd.f32 %v303, 8192.0
    %v496 = vadd.f32 %v304, 8192.0
    %v497 = vadd.f32 %v305, 8192.0
    %v498 = vadd.f32 %v306, 8192.0
    %v499 = vadd.f32 %v307, 8192.0
    %v500 = vadd.f32 %v308, 8192.0
    %v501 = vsub.f32 %v477, 8192.0
    %v502 = vsub.f32 %v478, 8192.0
    %v503 = vsub.f32 %v479, 8192.0
    %v504 = vsub.f32 %v480, 8192.0
    %v505 = vsub.f32 %v481, 8192.0
    %v506 = vsub.f32 %v482, 8192.0
    %v507 = vsub.f32 %v483, 8192.0
    %v508 = vsub.f32 %v484, 8192.0
    %v509 = vsub.f32 %v485, 8192.0
    %v510 = vsub.f32 %v486, 8192.0
    %v511 = vsub.f32 %v487, 8192.0
    %v512 = vsub.f32 %v488, 8192.0
    %v513 = vsub.f32 %v489, 8192.0
    %v514 = vsub.f32 %v490, 8192.0
    %v515 = vsub.f32 %v491, 8192.0
    %v516 = vsub.f32 %v492, 8192.0
    %v517 = vsub.f32 %v493, 8192.0
    %v518 = vsub.f32 %v494, 8192.0
    %v519 = vsub.f32 %v495, 8192.0
    %v520 = vsub.f32 %v496, 8192.0
    %v521 = vsub.f32 %v497, 8192.0
    %v522 = vsub.f32 %v498, 8192.0
    %v523 = vsub.f32 %v499, 8192.0
    %v524 = vsub.f32 %v500, 8192.0
    %vm525 = vcmp.lt.f32.partialorder %v285, 0.0078125
    %vm526 = vcmp.lt.f32.partialorder %v286, 0.0078125
    %vm527 = vcmp.lt.f32.partialorder %v287, 0.0078125
    %vm528 = vcmp.lt.f32.partialorder %v288, 0.0078125
    %vm529 = vcmp.lt.f32.partialorder %v289, 0.0078125
    %vm530 = vcmp.lt.f32.partialorder %v290, 0.0078125
    %vm531 = vcmp.lt.f32.partialorder %v291, 0.0078125
    %vm532 = vcmp.lt.f32.partialorder %v292, 0.0078125
    %vm533 = vcmp.lt.f32.partialorder %v293, 0.0078125
    %vm534 = vcmp.lt.f32.partialorder %v294, 0.0078125
    %vm535 = vcmp.lt.f32.partialorder %v295, 0.0078125
    %vm536 = vcmp.lt.f32.partialorder %v296, 0.0078125
    %vm537 = vcmp.lt.f32.partialorder %v297, 0.0078125
    %vm538 = vcmp.lt.f32.partialorder %v298, 0.0078125
    %vm539 = vcmp.lt.f32.partialorder %v299, 0.0078125
    %vm540 = vcmp.lt.f32.partialorder %v300, 0.0078125
    %vm541 = vcmp.lt.f32.partialorder %v301, 0.0078125
    %vm542 = vcmp.lt.f32.partialorder %v302, 0.0078125
    %vm543 = vcmp.lt.f32.partialorder %v303, 0.0078125
    %vm544 = vcmp.lt.f32.partialorder %v304, 0.0078125
    %vm545 = vcmp.lt.f32.partialorder %v305, 0.0078125
    %vm546 = vcmp.lt.f32.partialorder %v306, 0.0078125
    %vm547 = vcmp.lt.f32.partialorder %v307, 0.0078125
    %vm548 = vcmp.lt.f32.partialorder %v308, 0.0078125
    %v549 = vsel %vm525, %v501, %v429
    %v550 = vsel %vm526, %v502, %v430
    %v551 = vsel %vm527, %v503, %v431
    %v552 = vsel %vm528, %v504, %v432
    %v553 = vsel %vm529, %v505, %v433
    %v554 = vsel %vm530, %v506, %v434
    %v555 = vsel %vm531, %v507, %v435
    %v556 = vsel %vm532, %v508, %v436
    %v557 = vsel %vm533, %v509, %v437
    %v558 = vsel %vm534, %v510, %v438
    %v559 = vsel %vm535, %v511, %v439
    %v560 = vsel %vm536, %v512, %v440
    %v561 = vsel %vm537, %v513, %v441
    %v562 = vsel %vm538, %v514, %v442
    %v563 = vsel %vm539, %v515, %v443
    %v564 = vsel %vm540, %v516, %v444
    %v565 = vsel %vm541, %v517, %v445
    %v566 = vsel %vm542, %v518, %v446
    %v567 = vsel %vm543, %v519, %v447
    %v568 = vsel %vm544, %v520, %v448
    %v569 = vsel %vm545, %v521, %v449
    %v570 = vsel %vm546, %v522, %v450
    %v571 = vsel %vm547, %v523, %v451
    %v572 = vsel %vm548, %v524, %v452
    %vm573 = vcmp.lt.f32.partialorder %v261, 0.0
    %vm574 = vcmp.lt.f32.partialorder %v262, 0.0
    %vm575 = vcmp.lt.f32.partialorder %v263, 0.0
    %vm576 = vcmp.lt.f32.partialorder %v264, 0.0
    %vm577 = vcmp.lt.f32.partialorder %v265, 0.0
    %vm578 = vcmp.lt.f32.partialorder %v266, 0.0
    %vm579 = vcmp.lt.f32.partialorder %v267, 0.0
    %vm580 = vcmp.lt.f32.partialorder %v268, 0.0
    %vm581 = vcmp.lt.f32.partialorder %v269, 0.0
    %vm582 = vcmp.lt.f32.partialorder %v270, 0.0
    %vm583 = vcmp.lt.f32.partialorder %v271, 0.0
    %vm584 = vcmp.lt.f32.partialorder %v272, 0.0
    %vm585 = vcmp.lt.f32.partialorder %v273, 0.0
    %vm586 = vcmp.lt.f32.partialorder %v274, 0.0
    %vm587 = vcmp.lt.f32.partialorder %v275, 0.0
    %vm588 = vcmp.lt.f32.partialorder %v276, 0.0
    %vm589 = vcmp.lt.f32.partialorder %v277, 0.0
    %vm590 = vcmp.lt.f32.partialorder %v278, 0.0
    %vm591 = vcmp.lt.f32.partialorder %v279, 0.0
    %vm592 = vcmp.lt.f32.partialorder %v280, 0.0
    %vm593 = vcmp.lt.f32.partialorder %v281, 0.0
    %vm594 = vcmp.lt.f32.partialorder %v282, 0.0
    %vm595 = vcmp.lt.f32.partialorder %v283, 0.0
    %vm596 = vcmp.lt.f32.partialorder %v284, 0.0
    %v597 = vsub.f32 0.0, %v549
    %v598 = vsub.f32 0.0, %v550
    %v599 = vsub.f32 0.0, %v551
    %v600 = vsub.f32 0.0, %v552
    %v601 = vsub.f32 0.0, %v553
    %v602 = vsub.f32 0.0, %v554
    %v603 = vsub.f32 0.0, %v555
    %v604 = vsub.f32 0.0, %v556
    %v605 = vsub.f32 0.0, %v557
    %v606 = vsub.f32 0.0, %v558
    %v607 = vsub.f32 0.0, %v559
    %v608 = vsub.f32 0.0, %v560
    %v609 = vsub.f32 0.0, %v561
    %v610 = vsub.f32 0.0, %v562
    %v611 = vsub.f32 0.0, %v563
    %v612 = vsub.f32 0.0, %v564
    %v613 = vsub.f32 0.0, %v565
    %v614 = vsub.f32 0.0, %v566
    %v615 = vsub.f32 0.0, %v567
    %v616 = vsub.f32 0.0, %v568
    %v617 = vsub.f32 0.0, %v569
    %v618 = vsub.f32 0.0, %v570
    %v619 = vsub.f32 0.0, %v571
    %v620 = vsub.f32 0.0, %v572
    %v621 = vsel %vm573, %v597, %v549
    %v622 = vsel %vm574, %v598, %v550
    %v623 = vsel %vm575, %v599, %v551
    %v624 = vsel %vm576, %v600, %v552
    %v625 = vsel %vm577, %v601, %v553
    %v626 = vsel %vm578, %v602, %v554
    %v627 = vsel %vm579, %v603, %v555
    %v628 = vsel %vm580, %v604, %v556
    %v629 = vsel %vm581, %v605, %v557
    %v630 = vsel %vm582, %v606, %v558
    %v631 = vsel %vm583, %v607, %v559
    %v632 = vsel %vm584, %v608, %v560
    %v633 = vsel %vm585, %v609, %v561
    %v634 = vsel %vm586, %v610, %v562
    %v635 = vsel %vm587, %v611, %v563
    %v636 = vsel %vm588, %v612, %v564
    %v637 = vsel %vm589, %v613, %v565
    %v638 = vsel %vm590, %v614, %v566
    %v639 = vsel %vm591, %v615, %v567
    %v640 = vsel %vm592, %v616, %v568
    %v641 = vsel %vm593, %v617, %v569
    %v642 = vsel %vm594, %v618, %v570
    %v643 = vsel %vm595, %v619, %v571
    %v644 = vsel %vm596, %v620, %v572
    %v645 = vpack.c.bf16 %v623, %v621
    %v646 = vpack.c.bf16 %v624, %v622
    %v647 = vpack.c.bf16 %v627, %v625
    %v648 = vpack.c.bf16 %v628, %v626
    %v649 = vpack.c.bf16 %v631, %v629
    %v650 = vpack.c.bf16 %v632, %v630
    %v651 = vpack.c.bf16 %v635, %v633
    %v652 = vpack.c.bf16 %v636, %v634
    %v653 = vpack.c.bf16 %v639, %v637
    %v654 = vpack.c.bf16 %v640, %v638
    %v655 = vpack.c.bf16 %v643, %v641
    %v656 = vpack.c.bf16 %v644, %v642
    %v657 = vld [vmem:[#allocation7] sm:$0xf]
    %v658 = vld [vmem:[#allocation7 + $0x4] sm:$0xf]
    %v659 = vld [vmem:[#allocation7 + $0x8] sm:$0xf]
    %v660 = vld [vmem:[#allocation7 + $0xc] sm:$0xf]
    %v661 = vld [vmem:[#allocation7 + $0x10] sm:$0xf]
    %v662 = vld [vmem:[#allocation7 + $0x14] sm:$0xf]
    %v663 = vld [vmem:[#allocation7 + $0x18] sm:$0xf]
    %v664 = vld [vmem:[#allocation7 + $0x1c] sm:$0xf]
    %v665 = vld [vmem:[#allocation7 + $0x20] sm:$0xf]
    %v666 = vld [vmem:[#allocation7 + $0x24] sm:$0xf]
    %v667 = vld [vmem:[#allocation7 + $0x28] sm:$0xf]
    %v668 = vld [vmem:[#allocation7 + $0x2c] sm:$0xf]
    %v669 = vld [vmem:[#allocation7 + $0x30] sm:$0xf]
    %v670 = vld [vmem:[#allocation7 + $0x34] sm:$0xf]
    %v671 = vld [vmem:[#allocation7 + $0x38] sm:$0xf]
    %v672 = vld [vmem:[#allocation7 + $0x3c] sm:$0xf]
    %v673 = vld [vmem:[#allocation7 + $0x40] sm:$0xf]
    %v674 = vld [vmem:[#allocation7 + $0x44] sm:$0xf]
    %v675 = vld [vmem:[#allocation7 + $0x48] sm:$0xf]
    %v676 = vld [vmem:[#allocation7 + $0x4c] sm:$0xf]
    %v677 = vld [vmem:[#allocation7 + $0x50] sm:$0xf]
    %v678 = vld [vmem:[#allocation7 + $0x54] sm:$0xf]
    %v679 = vld [vmem:[#allocation7 + $0x58] sm:$0xf]
    %v680 = vld [vmem:[#allocation7 + $0x5c] sm:$0xf]
    %v681 = vld [vmem:[#allocation7 + $0x60] sm:$0xf]
    %v682 = vld [vmem:[#allocation7 + $0x64] sm:$0xf]
    %v683 = vld [vmem:[#allocation7 + $0x68] sm:$0xf]
    %v684 = vld [vmem:[#allocation7 + $0x6c] sm:$0xf]
    %v685 = vld [vmem:[#allocation7 + $0x70] sm:$0xf]
    %v686 = vld [vmem:[#allocation7 + $0x74] sm:$0xf]
    %v687 = vld [vmem:[#allocation7 + $0x78] sm:$0xf]
    %v688 = vld [vmem:[#allocation7 + $0x7c] sm:$0xf]
    %v721 = vunpack.c.l.b16 %v657
    %v722 = vunpack.c.l.b16 %v658
    %v723 = vunpack.c.l.b16 %v659
    %v724 = vunpack.c.l.b16 %v660
    %v725 = vunpack.c.l.b16 %v661
    %v726 = vunpack.c.l.b16 %v662
    %v727 = vunpack.c.l.b16 %v663
    %v728 = vunpack.c.l.b16 %v664
    %v729 = vunpack.c.l.b16 %v665
    %v730 = vunpack.c.l.b16 %v666
    %v731 = vunpack.c.l.b16 %v667
    %v732 = vunpack.c.l.b16 %v668
    %v733 = vunpack.c.l.b16 %v669
    %v734 = vunpack.c.l.b16 %v670
    %v735 = vunpack.c.l.b16 %v671
    %v736 = vunpack.c.l.b16 %v672
    %v737 = vunpack.c.l.b16 %v673
    %v738 = vunpack.c.l.b16 %v674
    %v739 = vunpack.c.l.b16 %v675
    %v740 = vunpack.c.l.b16 %v676
    %v741 = vunpack.c.l.b16 %v677
    %v742 = vunpack.c.l.b16 %v678
    %v743 = vunpack.c.l.b16 %v679
    %v744 = vunpack.c.l.b16 %v680
    %v745 = vunpack.c.l.b16 %v681
    %v746 = vunpack.c.l.b16 %v682
    %v747 = vunpack.c.l.b16 %v683
    %v748 = vunpack.c.l.b16 %v684
    %v749 = vunpack.c.l.b16 %v685
    %v750 = vunpack.c.l.b16 %v686
    %v751 = vunpack.c.l.b16 %v687
    %v752 = vunpack.c.l.b16 %v688
    %v753 = vpack.c.b16 %v722, %v721
    %v754 = vpack.c.b16 %v724, %v723
    %v755 = vpack.c.b16 %v726, %v725
    %v756 = vpack.c.b16 %v728, %v727
    %v757 = vpack.c.b16 %v730, %v729
    %v758 = vpack.c.b16 %v732, %v731
    %v759 = vpack.c.b16 %v734, %v733
    %v760 = vpack.c.b16 %v736, %v735
    %v761 = vpack.c.b16 %v738, %v737
    %v762 = vpack.c.b16 %v740, %v739
    %v763 = vpack.c.b16 %v742, %v741
    %v764 = vpack.c.b16 %v744, %v743
    %v765 = vpack.c.b16 %v746, %v745
    %v766 = vpack.c.b16 %v748, %v747
    %v767 = vpack.c.b16 %v750, %v749
    %v768 = vpack.c.b16 %v752, %v751
    %785 = vmatpush.bf16.msra.mxu0 %v760
    %786 = vmatpush.bf16.msra.mxu0 %v759
    %787 = vmatpush.bf16.msra.mxu0 %v758
    %788 = vmatpush.bf16.msra.mxu0 %v757
    %789 = vmatpush.bf16.msra.mxu0 %v756
    %790 = vmatpush.bf16.msra.mxu0 %v755
    %791 = vmatpush.bf16.msra.mxu0 %v754
    %792 = vmatpush.bf16.msra.mxu0 %v753
    %793 = vmatmul.bf16.gmra.mxu0 %v645
    %v794 = vpop.f32.mrf.mxu0
    %v795 = vadd.f32 0.0, %v794
    %v796 = vpop.f32.mrf.mxu0
    %v797 = vadd.f32 0.0, %v796
    %798 = vmatmul.bf16.gmra.mxu0 %v647
    %v799 = vpop.f32.mrf.mxu0
    %v800 = vadd.f32 0.0, %v799
    %v801 = vpop.f32.mrf.mxu0
    %v802 = vadd.f32 0.0, %v801
    %803 = vmatmul.bf16.gmra.mxu0 %v649
    %v804 = vpop.f32.mrf.mxu0
    %v805 = vadd.f32 0.0, %v804
    %v806 = vpop.f32.mrf.mxu0
    %v807 = vadd.f32 0.0, %v806
    %808 = vmatmul.bf16.gmra.mxu0 %v651
    %v809 = vpop.f32.mrf.mxu0
    %v810 = vadd.f32 0.0, %v809
    %v811 = vpop.f32.mrf.mxu0
    %v812 = vadd.f32 0.0, %v811
    %813 = vmatmul.bf16.gmra.mxu0 %v653
    %v814 = vpop.f32.mrf.mxu0
    %v815 = vadd.f32 0.0, %v814
    %v816 = vpop.f32.mrf.mxu0
    %v817 = vadd.f32 0.0, %v816
    %818 = vmatmul.bf16.gmra.mxu0 %v655
    %v819 = vpop.f32.mrf.mxu0
    %v820 = vadd.f32 0.0, %v819
    %v821 = vpop.f32.mrf.mxu0
    %v822 = vadd.f32 0.0, %v821
    %823 = vdwg.mxu0
    %824 = vmatpush.bf16.msra.mxu0 %v768
    %825 = vmatpush.bf16.msra.mxu0 %v767
    %826 = vmatpush.bf16.msra.mxu0 %v766
    %827 = vmatpush.bf16.msra.mxu0 %v765
    %828 = vmatpush.bf16.msra.mxu0 %v764
    %829 = vmatpush.bf16.msra.mxu0 %v763
    %830 = vmatpush.bf16.msra.mxu0 %v762
    %831 = vmatpush.bf16.msra.mxu0 %v761
    %832 = vmatmul.bf16.gmra.mxu0 %v646
    %v833 = vpop.f32.mrf.mxu0
    %v834 = vadd.f32 %v795, %v833
    %v835 = vpop.f32.mrf.mxu0
    %v836 = vadd.f32 %v797, %v835
    %837 = vmatmul.bf16.gmra.mxu0 %v648
    %v838 = vpop.f32.mrf.mxu0
    %v839 = vadd.f32 %v800, %v838
    %v840 = vpop.f32.mrf.mxu0
    %v841 = vadd.f32 %v802, %v840
    %842 = vmatmul.bf16.gmra.mxu0 %v650
    %v843 = vpop.f32.mrf.mxu0
    %v844 = vadd.f32 %v805, %v843
    %v845 = vpop.f32.mrf.mxu0
    %v846 = vadd.f32 %v807, %v845
    %847 = vmatmul.bf16.gmra.mxu0 %v652
    %v848 = vpop.f32.mrf.mxu0
    %v849 = vadd.f32 %v810, %v848
    %v850 = vpop.f32.mrf.mxu0
    %v851 = vadd.f32 %v812, %v850
    %852 = vmatmul.bf16.gmra.mxu0 %v654
    %v853 = vpop.f32.mrf.mxu0
    %v854 = vadd.f32 %v815, %v853
    %v855 = vpop.f32.mrf.mxu0
    %v856 = vadd.f32 %v817, %v855
    %857 = vmatmul.bf16.gmra.mxu0 %v656
    %v858 = vpop.f32.mrf.mxu0
    %v859 = vadd.f32 %v820, %v858
    %v860 = vpop.f32.mrf.mxu0
    %v861 = vadd.f32 %v822, %v860
    %862 = vdwg.mxu0
    %v863 = vpack.c.bf16 %v834, %v834
    %v864 = vpack.c.bf16 %v836, %v836
    %v865 = vpack.c.bf16 %v839, %v839
    %v866 = vpack.c.bf16 %v841, %v841
    %v867 = vpack.c.bf16 %v844, %v844
    %v868 = vpack.c.bf16 %v846, %v846
    %v869 = vpack.c.bf16 %v849, %v849
    %v870 = vpack.c.bf16 %v851, %v851
    %v871 = vpack.c.bf16 %v854, %v854
    %v872 = vpack.c.bf16 %v856, %v856
    %v873 = vpack.c.bf16 %v859, %v859
    %v874 = vpack.c.bf16 %v861, %v861
    %s875 = sld [smem:[#allocation3 + $0x1]]
    %p877 = scmp.ne.f32.partialorder %s875, %s875
    %s878 = sshrl.u32 %s875, 16
    %s879 = sand.u32 %s878, 1
    %s880 = sadd.s32 32767, %s879
    %s881 = sadd.s32 %s875, %s880
    %s882 = sand.u32 %s881, 4294901760
    %s883 = scalar_select %p877, 2143289344, %s882
    %s885 = sshrl.u32 %s883, 16
    %s886 = sshll.u32 %s885, 16
    %s887 = sor.u32 %s885, %s886
    %v888 = vstv %s887
    %v890 = vunpack.c.l.bf16 %v863
    %v891 = vunpack.c.l.bf16 %v864
    %v892 = vunpack.c.l.bf16 %v865
    %v893 = vunpack.c.l.bf16 %v866
    %v894 = vunpack.c.l.bf16 %v867
    %v895 = vunpack.c.l.bf16 %v868
    %v896 = vunpack.c.l.bf16 %v869
    %v897 = vunpack.c.l.bf16 %v870
    %v898 = vunpack.c.l.bf16 %v871
    %v899 = vunpack.c.l.bf16 %v872
    %v900 = vunpack.c.l.bf16 %v873
    %v901 = vunpack.c.l.bf16 %v874
    %v902 = vunpack.c.l.bf16 %v888
    %v903 = vmul.f32 %v890, %v902
    %v904 = vmul.f32 %v891, %v902
    %v905 = vmul.f32 %v892, %v902
    %v906 = vmul.f32 %v893, %v902
    %v907 = vmul.f32 %v894, %v902
    %v908 = vmul.f32 %v895, %v902
    %v909 = vmul.f32 %v896, %v902
    %v910 = vmul.f32 %v897, %v902
    %v911 = vmul.f32 %v898, %v902
    %v912 = vmul.f32 %v899, %v902
    %v913 = vmul.f32 %v900, %v902
    %v914 = vmul.f32 %v901, %v902
    %v915 = vpack.c.bf16 %v903, %v903
    %v916 = vpack.c.bf16 %v904, %v904
    %v917 = vpack.c.bf16 %v905, %v905
    %v918 = vpack.c.bf16 %v906, %v906
    %v919 = vpack.c.bf16 %v907, %v907
    %v920 = vpack.c.bf16 %v908, %v908
    %v921 = vpack.c.bf16 %v909, %v909
    %v922 = vpack.c.bf16 %v910, %v910
    %v923 = vpack.c.bf16 %v911, %v911
    %v924 = vpack.c.bf16 %v912, %v912
    %v925 = vpack.c.bf16 %v913, %v913
    %v926 = vpack.c.bf16 %v914, %v914
    %s927 = sld [smem:[#allocation3 + $0x2]]
    %p929 = scmp.ne.f32.partialorder %s927, %s927
    %s930 = sshrl.u32 %s927, 16
    %s931 = sand.u32 %s930, 1
    %s932 = sadd.s32 32767, %s931
    %s933 = sadd.s32 %s927, %s932
    %s934 = sand.u32 %s933, 4294901760
    %s935 = scalar_select %p929, 2143289344, %s934
    %s937 = sshrl.u32 %s935, 16
    %s938 = sshll.u32 %s937, 16
    %s939 = sor.u32 %s937, %s938
    %v940 = vstv %s939
    %v942 = vunpack.c.l.bf16 %v915
    %v943 = vunpack.c.l.bf16 %v916
    %v944 = vunpack.c.l.bf16 %v917
    %v945 = vunpack.c.l.bf16 %v918
    %v946 = vunpack.c.l.bf16 %v919
    %v947 = vunpack.c.l.bf16 %v920
    %v948 = vunpack.c.l.bf16 %v921
    %v949 = vunpack.c.l.bf16 %v922
    %v950 = vunpack.c.l.bf16 %v923
    %v951 = vunpack.c.l.bf16 %v924
    %v952 = vunpack.c.l.bf16 %v925
    %v953 = vunpack.c.l.bf16 %v926
    %v954 = vunpack.c.l.bf16 %v940
    %v955 = vmul.f32 %v942, %v954
    %v956 = vmul.f32 %v943, %v954
    %v957 = vmul.f32 %v944, %v954
    %v958 = vmul.f32 %v945, %v954
    %v959 = vmul.f32 %v946, %v954
    %v960 = vmul.f32 %v947, %v954
    %v961 = vmul.f32 %v948, %v954
    %v962 = vmul.f32 %v949, %v954
    %v963 = vmul.f32 %v950, %v954
    %v964 = vmul.f32 %v951, %v954
    %v965 = vmul.f32 %v952, %v954
    %v966 = vmul.f32 %v953, %v954
    %v967 = vpack.c.bf16 %v955, %v955
    %v968 = vpack.c.bf16 %v956, %v956
    %v969 = vpack.c.bf16 %v957, %v957
    %v970 = vpack.c.bf16 %v958, %v958
    %v971 = vpack.c.bf16 %v959, %v959
    %v972 = vpack.c.bf16 %v960, %v960
    %v973 = vpack.c.bf16 %v961, %v961
    %v974 = vpack.c.bf16 %v962, %v962
    %v975 = vpack.c.bf16 %v963, %v963
    %v976 = vpack.c.bf16 %v964, %v964
    %v977 = vpack.c.bf16 %v965, %v965
    %v978 = vpack.c.bf16 %v966, %v966
    %979 = vst [vmem:[#allocation9] sm:$0xf] %v967
    %980 = vst [vmem:[#allocation9 + $0x4] sm:$0xf] %v968
    %981 = vst [vmem:[#allocation9 + $0x8] sm:$0xf] %v969
    %982 = vst [vmem:[#allocation9 + $0xc] sm:$0xf] %v970
    %983 = vst [vmem:[#allocation9 + $0x10] sm:$0xf] %v971
    %984 = vst [vmem:[#allocation9 + $0x14] sm:$0xf] %v972
    %985 = vst [vmem:[#allocation9 + $0x18] sm:$0xf] %v973
    %986 = vst [vmem:[#allocation9 + $0x1c] sm:$0xf] %v974
    %987 = vst [vmem:[#allocation9 + $0x20] sm:$0xf] %v975
    %988 = vst [vmem:[#allocation9 + $0x24] sm:$0xf] %v976
    %989 = vst [vmem:[#allocation9 + $0x28] sm:$0xf] %v977
    %990 = vst [vmem:[#allocation9 + $0x2c] sm:$0xf] %v978
    // Predicated region
    $region18: #{wave_quant_linear.1} parent=1 // pred_check
      _
    $region19: #{wave_quant_linear.1} parent=1 // pred_check_branch
      %992 = sbr.rel (0) target = $region21
    $region20: #{wave_quant_linear.1} parent=1 // pred_region
      %994 = vsyncadd [#allocation6], 0
      %s995 = sshll.u32 [#allocation9], 4
      %s996 = int_to_ptr.vmem [resolvable:$true] %s995
      %s997 = sshll.u32 %s3, 4
      %s998 = int_to_ptr.hbm [resolvable:$true] %s997
      %1003 = dma.vmem_to_hbm [thread:$0]  %s996, 768, %s998, [#allocation6], 64, 64, 4
    $region21: #{wave_quant_linear.1} parent=1 // pred_fallthru
      _
    // Predicated region
    $region22: #{wave_quant_linear.1} parent=1 // pred_check
      _
    $region23: #{wave_quant_linear.1} parent=1 // pred_check_branch
      %1005 = sbr.rel (0) target = $region25
    $region24: #{wave_quant_linear.1} parent=1 // pred_region
      %1007 = dma.done [#allocation6], 768
    $region25: #{wave_quant_linear.1} parent=1 // pred_fallthru
      _
    %1008 = vsyncpa [#allocation5], 1
    %1009 = vsyncpa [#allocation8], 1
    %1010 = vsyncpa [#allocation6], 1

</llo_original>
